<compile_context>
chip_gen: v7x
topology: tpu7x:2x2x1
jax: 0.10.0
libtpu: 0.0.40
codegen_flags: <defaults>
</compile_context>

<pallas_src>
import functools

import jax
import jax.numpy as jnp
from jax import lax
from jax.experimental import pallas as pl
from jax.experimental.pallas import tpu as pltpu

# ----------------------------- config ---------------------------------------
BATCH = 2
SEQ = 8            # T  (<= context_window)
MODEL_DIM = 32     # C
NUM_HEADS = 4      # H
HEAD_SIZE = 8      # hs
CONTEXT_WINDOW = 8
DROPOUT = 0.1      # identity in eval-mode forward

HHS = NUM_HEADS * HEAD_SIZE   # concatenated head width (= 32)
BT = BATCH * SEQ              # flattened rows (= 16)


# ----------------------------- kernel ---------------------------------------
def mha_kernel(x_ref, wqkv_ref, wp_ref, bp_ref, bias_ref, o_ref):
    """Whole-batch multi-head causal self-attention, fully 2-D.

    x_ref    : (B*T, C)        f32   input activations
    wqkv_ref : (C, 3*H*hs)     bf16  fused [Wq*scale | Wk | Wv]
    wp_ref   : (H*hs, C)       bf16  output projection weight
    bp_ref   : (1, C)          f32   output projection bias
    bias_ref : (B*T, B*T)      f32   additive block-diag causal mask (0/-1e9)
    o_ref    : (B*T, C)        f32   output
    """
    x_bf = x_ref[...].astype(jnp.bfloat16)                       # (BT, C)

    # Fused QKV projection: one bf16 MXU push, f32 accumulation.
    qkv = jnp.dot(x_bf, wqkv_ref[...],
                  preferred_element_type=jnp.float32)            # (BT, 3*HHS)

    bias = bias_ref[...]                                         # (BT, BT)

    head_outs = []
    for h in range(NUM_HEADS):
        s = h * HEAD_SIZE
        q = qkv[:, s:s + HEAD_SIZE]                              # (BT, hs) f32
        k = qkv[:, HHS + s:HHS + s + HEAD_SIZE]
        v = qkv[:, 2 * HHS + s:2 * HHS + s + HEAD_SIZE]

        # Scores over all (batch*time) rows at once; cross-batch entries are
        # killed by the block-diagonal additive bias.  Scale is folded into Wq.
        sc = lax.dot_general(
            q.astype(jnp.bfloat16), k.astype(jnp.bfloat16),
            dimension_numbers=(((1,), (1,)), ((), ())),
            preferred_element_type=jnp.float32)                  # (BT, BT)
        sc = sc + bias

        # Numerically-stable softmax along the key axis (f32 throughout).
        sc = sc - sc.max(axis=-1, keepdims=True)
        p = jnp.exp(sc)
        wei = p * pl.reciprocal(p.sum(axis=-1, keepdims=True), approx=True)

        ho = jnp.dot(wei.astype(jnp.bfloat16), v.astype(jnp.bfloat16),
                     preferred_element_type=jnp.float32)         # (BT, hs)
        head_outs.append(ho)

    # Lane-axis concat in registers (no VMEM scratch), single projection.
    cat = jnp.concatenate(head_outs, axis=-1)                    # (BT, HHS)
    out2d = jnp.dot(cat.astype(jnp.bfloat16), wp_ref[...],
                    preferred_element_type=jnp.float32) + bp_ref[...]
    o_ref[...] = out2d.astype(o_ref.dtype)


# ----------------------------- wrapper ---------------------------------------
@jax.jit
def multi_head_attention(x, wqkv_bf, wp_bf, bp, bias):
    B, T, C = x.shape
    x2d = x.reshape(B * T, C)

    vmem = pl.BlockSpec(memory_space=pltpu.MemorySpace.VMEM)
    out2d = pl.pallas_call(
        mha_kernel,
        out_shape=jax.ShapeDtypeStruct((B * T, C), x.dtype),
        in_specs=[vmem, vmem, vmem, vmem, vmem],
        out_specs=vmem,
    )(x2d, wqkv_bf, wp_bf, bp, bias)
    return out2d.reshape(B, T, C)


# ----------------------- parameter-setup helpers ------------------------------
def build_fused_params(wq, wk, wv, wp):
    """One-time setup: fold 1/sqrt(hs) into Wq, fuse [Wq|Wk|Wv], cast to bf16."""
    scale = 1.0 / (HEAD_SIZE ** 0.5)
    wqkv = jnp.concatenate([wq * scale, wk, wv], axis=1)         # (C, 3*HHS)
    return wqkv.astype(jnp.bfloat16), wp.astype(jnp.bfloat16)


def build_bias_mask(B, T):
    """Block-diagonal causal additive bias over flattened (B*T) rows/keys."""
    idx = jnp.arange(B * T)
    b = idx // T
    t = idx % T
    same_batch = b[:, None] == b[None, :]
    causal = t[:, None] >= t[None, :]
    allowed = jnp.logical_and(same_batch, causal)
    return jnp.where(allowed, 0.0, -1e9).astype(jnp.float32)     # (B*T, B*T)


# ----------------------------- main ------------------------------------------
if __name__ == "__main__":
    key = jax.random.PRNGKey(0)
    kx, kq, kk, kv, kp, kb = jax.random.split(key, 6)

    # deterministic synthetic parameters (shapes match the PyTorch module)
    x = jax.random.normal(kx, (BATCH, SEQ, MODEL_DIM), dtype=jnp.float32)
    # per-head q/k/v weights stacked along the output dim: (C, H*hs)
    wq = jax.random.normal(kq, (MODEL_DIM, HHS), dtype=jnp.float32) * 0.1
    wk = jax.random.normal(kk, (MODEL_DIM, HHS), dtype=jnp.float32) * 0.1
    wv = jax.random.normal(kv, (MODEL_DIM, HHS), dtype=jnp.float32) * 0.1
    # output projection nn.Linear(H*hs, C): weight (H*hs, C) in x@W layout
    wp = jax.random.normal(kp, (HHS, MODEL_DIM), dtype=jnp.float32) * 0.1
    bp = jax.random.normal(kb, (1, MODEL_DIM), dtype=jnp.float32) * 0.01

    # one-time parameter setup (kept out of the per-call path)
    wqkv_bf, wp_bf = build_fused_params(wq, wk, wv, wp)
    bias = build_bias_mask(BATCH, SEQ)

    out = multi_head_attention(x, wqkv_bf, wp_bf, bp, bias)
    jax.block_until_ready(out)

    # quick sanity check against a pure-JAX f32 reference
    def ref(x, wq, wk, wv, wp, bp):
        scale = 1.0 / (HEAD_SIZE ** 0.5)
        T = x.shape[1]
        mask = jnp.tril(jnp.ones((T, T), bool))
        outs = []
        for h in range(NUM_HEADS):
            s = h * HEAD_SIZE
            q = x @ wq[:, s:s + HEAD_SIZE]
            k = x @ wk[:, s:s + HEAD_SIZE]
            v = x @ wv[:, s:s + HEAD_SIZE]
            sc = jnp.einsum("btd,bsd->bts", q, k) * scale
            sc = jnp.where(mask[None], sc, -jnp.inf)
            w = jax.nn.softmax(sc, axis=-1)
            outs.append(jnp.einsum("bts,bsd->btd", w, v))
        cat = jnp.concatenate(outs, axis=-1)
        return cat @ wp + bp[0]

    expected = ref(x, wq, wk, wv, wp, bp)
    # bf16 MXU operands (+ approx reciprocal) => looser tolerance than pure f32
    assert jnp.allclose(out, expected, atol=2e-2, rtol=2e-2), \
        "mismatch vs reference"

    print("KERNEL_OK")
</pallas_src>

<mosaic_0001>
module attributes {stable_mosaic.version = 11 : i64} {
  func.func @mha_kernel(%arg0: memref<16x32xf32, #tpu.memory_space<vmem>>, %arg1: memref<32x96xbf16, #tpu.memory_space<vmem>>, %arg2: memref<32x32xbf16, #tpu.memory_space<vmem>>, %arg3: memref<1x32xf32, #tpu.memory_space<vmem>>, %arg4: memref<16x16xf32, #tpu.memory_space<vmem>>, %arg5: memref<16x32xf32, #tpu.memory_space<vmem>>) attributes {dimension_semantics = [], scalar_prefetch = 0 : i64, scratch_operands = 0 : i64, tpu.core_type = #tpu.core_type<tc>} {
    %c0 = arith.constant 0 : index
    %c0_0 = arith.constant 0 : index
    %0 = vector.load %arg0[%c0, %c0_0] : memref<16x32xf32, #tpu.memory_space<vmem>>, vector<16x32xf32>
    %1 = arith.truncf %0 : vector<16x32xf32> to vector<16x32xbf16>
    %c0_1 = arith.constant 0 : index
    %c0_2 = arith.constant 0 : index
    %2 = vector.load %arg1[%c0_1, %c0_2] : memref<32x96xbf16, #tpu.memory_space<vmem>>, vector<32x96xbf16>
    %cst = arith.constant dense<0.000000e+00> : vector<16x96xf32>
    %3 = tpu.matmul %1, %2, %cst {dimension_numbers = #tpu.dot_dimension_numbers<[1], [0], [0], [1], [0, 0, 1, 1], [], []>} : vector<16x32xbf16>, vector<32x96xbf16>, vector<16x96xf32> -> vector<16x96xf32>
    %c0_3 = arith.constant 0 : index
    %c0_4 = arith.constant 0 : index
    %4 = vector.load %arg4[%c0_3, %c0_4] : memref<16x16xf32, #tpu.memory_space<vmem>>, vector<16x16xf32>
    %5 = vector.extract_strided_slice %3 {offsets = [0, 0], sizes = [16, 8], strides = [1, 1]} : vector<16x96xf32> to vector<16x8xf32>
    %6 = vector.extract_strided_slice %3 {offsets = [0, 32], sizes = [16, 8], strides = [1, 1]} : vector<16x96xf32> to vector<16x8xf32>
    %7 = vector.extract_strided_slice %3 {offsets = [0, 64], sizes = [16, 8], strides = [1, 1]} : vector<16x96xf32> to vector<16x8xf32>
    %8 = arith.truncf %5 : vector<16x8xf32> to vector<16x8xbf16>
    %9 = arith.truncf %6 : vector<16x8xf32> to vector<16x8xbf16>
    %cst_5 = arith.constant dense<0.000000e+00> : vector<16x16xf32>
    %10 = tpu.matmul %8, %9, %cst_5 {dimension_numbers = #tpu.dot_dimension_numbers<[1], [1], [0], [0], [0, 0, 1, 0], [], []>} : vector<16x8xbf16>, vector<16x8xbf16>, vector<16x16xf32> -> vector<16x16xf32>
    %11 = arith.addf %10, %4 : vector<16x16xf32>
    %cst_6 = arith.constant dense<0xFF800000> : vector<16xf32>
    %12 = vector.multi_reduction <maximumf>, %11, %cst_6 [1] : vector<16x16xf32> to vector<16xf32>
    %13 = vector.shape_cast %12 : vector<16xf32> to vector<16x1xf32>
    %14 = vector.broadcast %13 : vector<16x1xf32> to vector<16x16xf32>
    %15 = arith.subf %11, %14 : vector<16x16xf32>
    %16 = math.exp %15 : vector<16x16xf32>
    %cst_7 = arith.constant dense<0.000000e+00> : vector<16xf32>
    %17 = vector.multi_reduction <add>, %16, %cst_7 [1] : vector<16x16xf32> to vector<16xf32>
    %18 = vector.shape_cast %17 : vector<16xf32> to vector<16x1xf32>
    %19 = tpu.reciprocal %18 {approx = true} : vector<16x1xf32> -> vector<16x1xf32>
    %20 = vector.broadcast %19 : vector<16x1xf32> to vector<16x16xf32>
    %21 = arith.mulf %16, %20 : vector<16x16xf32>
    %22 = arith.truncf %21 : vector<16x16xf32> to vector<16x16xbf16>
    %23 = arith.truncf %7 : vector<16x8xf32> to vector<16x8xbf16>
    %cst_8 = arith.constant dense<0.000000e+00> : vector<16x8xf32>
    %24 = tpu.matmul %22, %23, %cst_8 {dimension_numbers = #tpu.dot_dimension_numbers<[1], [0], [0], [1], [0, 0, 1, 1], [], []>} : vector<16x16xbf16>, vector<16x8xbf16>, vector<16x8xf32> -> vector<16x8xf32>
    %25 = vector.extract_strided_slice %3 {offsets = [0, 8], sizes = [16, 8], strides = [1, 1]} : vector<16x96xf32> to vector<16x8xf32>
    %26 = vector.extract_strided_slice %3 {offsets = [0, 40], sizes = [16, 8], strides = [1, 1]} : vector<16x96xf32> to vector<16x8xf32>
    %27 = vector.extract_strided_slice %3 {offsets = [0, 72], sizes = [16, 8], strides = [1, 1]} : vector<16x96xf32> to vector<16x8xf32>
    %28 = arith.truncf %25 : vector<16x8xf32> to vector<16x8xbf16>
    %29 = arith.truncf %26 : vector<16x8xf32> to vector<16x8xbf16>
    %cst_9 = arith.constant dense<0.000000e+00> : vector<16x16xf32>
    %30 = tpu.matmul %28, %29, %cst_9 {dimension_numbers = #tpu.dot_dimension_numbers<[1], [1], [0], [0], [0, 0, 1, 0], [], []>} : vector<16x8xbf16>, vector<16x8xbf16>, vector<16x16xf32> -> vector<16x16xf32>
    %31 = arith.addf %30, %4 : vector<16x16xf32>
    %cst_10 = arith.constant dense<0xFF800000> : vector<16xf32>
    %32 = vector.multi_reduction <maximumf>, %31, %cst_10 [1] : vector<16x16xf32> to vector<16xf32>
    %33 = vector.shape_cast %32 : vector<16xf32> to vector<16x1xf32>
    %34 = vector.broadcast %33 : vector<16x1xf32> to vector<16x16xf32>
    %35 = arith.subf %31, %34 : vector<16x16xf32>
    %36 = math.exp %35 : vector<16x16xf32>
    %cst_11 = arith.constant dense<0.000000e+00> : vector<16xf32>
    %37 = vector.multi_reduction <add>, %36, %cst_11 [1] : vector<16x16xf32> to vector<16xf32>
    %38 = vector.shape_cast %37 : vector<16xf32> to vector<16x1xf32>
    %39 = tpu.reciprocal %38 {approx = true} : vector<16x1xf32> -> vector<16x1xf32>
    %40 = vector.broadcast %39 : vector<16x1xf32> to vector<16x16xf32>
    %41 = arith.mulf %36, %40 : vector<16x16xf32>
    %42 = arith.truncf %41 : vector<16x16xf32> to vector<16x16xbf16>
    %43 = arith.truncf %27 : vector<16x8xf32> to vector<16x8xbf16>
    %cst_12 = arith.constant dense<0.000000e+00> : vector<16x8xf32>
    %44 = tpu.matmul %42, %43, %cst_12 {dimension_numbers = #tpu.dot_dimension_numbers<[1], [0], [0], [1], [0, 0, 1, 1], [], []>} : vector<16x16xbf16>, vector<16x8xbf16>, vector<16x8xf32> -> vector<16x8xf32>
    %45 = vector.extract_strided_slice %3 {offsets = [0, 16], sizes = [16, 8], strides = [1, 1]} : vector<16x96xf32> to vector<16x8xf32>
    %46 = vector.extract_strided_slice %3 {offsets = [0, 48], sizes = [16, 8], strides = [1, 1]} : vector<16x96xf32> to vector<16x8xf32>
    %47 = vector.extract_strided_slice %3 {offsets = [0, 80], sizes = [16, 8], strides = [1, 1]} : vector<16x96xf32> to vector<16x8xf32>
    %48 = arith.truncf %45 : vector<16x8xf32> to vector<16x8xbf16>
    %49 = arith.truncf %46 : vector<16x8xf32> to vector<16x8xbf16>
    %cst_13 = arith.constant dense<0.000000e+00> : vector<16x16xf32>
    %50 = tpu.matmul %48, %49, %cst_13 {dimension_numbers = #tpu.dot_dimension_numbers<[1], [1], [0], [0], [0, 0, 1, 0], [], []>} : vector<16x8xbf16>, vector<16x8xbf16>, vector<16x16xf32> -> vector<16x16xf32>
    %51 = arith.addf %50, %4 : vector<16x16xf32>
    %cst_14 = arith.constant dense<0xFF800000> : vector<16xf32>
    %52 = vector.multi_reduction <maximumf>, %51, %cst_14 [1] : vector<16x16xf32> to vector<16xf32>
    %53 = vector.shape_cast %52 : vector<16xf32> to vector<16x1xf32>
    %54 = vector.broadcast %53 : vector<16x1xf32> to vector<16x16xf32>
    %55 = arith.subf %51, %54 : vector<16x16xf32>
    %56 = math.exp %55 : vector<16x16xf32>
    %cst_15 = arith.constant dense<0.000000e+00> : vector<16xf32>
    %57 = vector.multi_reduction <add>, %56, %cst_15 [1] : vector<16x16xf32> to vector<16xf32>
    %58 = vector.shape_cast %57 : vector<16xf32> to vector<16x1xf32>
    %59 = tpu.reciprocal %58 {approx = true} : vector<16x1xf32> -> vector<16x1xf32>
    %60 = vector.broadcast %59 : vector<16x1xf32> to vector<16x16xf32>
    %61 = arith.mulf %56, %60 : vector<16x16xf32>
    %62 = arith.truncf %61 : vector<16x16xf32> to vector<16x16xbf16>
    %63 = arith.truncf %47 : vector<16x8xf32> to vector<16x8xbf16>
    %cst_16 = arith.constant dense<0.000000e+00> : vector<16x8xf32>
    %64 = tpu.matmul %62, %63, %cst_16 {dimension_numbers = #tpu.dot_dimension_numbers<[1], [0], [0], [1], [0, 0, 1, 1], [], []>} : vector<16x16xbf16>, vector<16x8xbf16>, vector<16x8xf32> -> vector<16x8xf32>
    %65 = vector.extract_strided_slice %3 {offsets = [0, 24], sizes = [16, 8], strides = [1, 1]} : vector<16x96xf32> to vector<16x8xf32>
    %66 = vector.extract_strided_slice %3 {offsets = [0, 56], sizes = [16, 8], strides = [1, 1]} : vector<16x96xf32> to vector<16x8xf32>
    %67 = vector.extract_strided_slice %3 {offsets = [0, 88], sizes = [16, 8], strides = [1, 1]} : vector<16x96xf32> to vector<16x8xf32>
    %68 = arith.truncf %65 : vector<16x8xf32> to vector<16x8xbf16>
    %69 = arith.truncf %66 : vector<16x8xf32> to vector<16x8xbf16>
    %cst_17 = arith.constant dense<0.000000e+00> : vector<16x16xf32>
    %70 = tpu.matmul %68, %69, %cst_17 {dimension_numbers = #tpu.dot_dimension_numbers<[1], [1], [0], [0], [0, 0, 1, 0], [], []>} : vector<16x8xbf16>, vector<16x8xbf16>, vector<16x16xf32> -> vector<16x16xf32>
    %71 = arith.addf %70, %4 : vector<16x16xf32>
    %cst_18 = arith.constant dense<0xFF800000> : vector<16xf32>
    %72 = vector.multi_reduction <maximumf>, %71, %cst_18 [1] : vector<16x16xf32> to vector<16xf32>
    %73 = vector.shape_cast %72 : vector<16xf32> to vector<16x1xf32>
    %74 = vector.broadcast %73 : vector<16x1xf32> to vector<16x16xf32>
    %75 = arith.subf %71, %74 : vector<16x16xf32>
    %76 = math.exp %75 : vector<16x16xf32>
    %cst_19 = arith.constant dense<0.000000e+00> : vector<16xf32>
    %77 = vector.multi_reduction <add>, %76, %cst_19 [1] : vector<16x16xf32> to vector<16xf32>
    %78 = vector.shape_cast %77 : vector<16xf32> to vector<16x1xf32>
    %79 = tpu.reciprocal %78 {approx = true} : vector<16x1xf32> -> vector<16x1xf32>
    %80 = vector.broadcast %79 : vector<16x1xf32> to vector<16x16xf32>
    %81 = arith.mulf %76, %80 : vector<16x16xf32>
    %82 = arith.truncf %81 : vector<16x16xf32> to vector<16x16xbf16>
    %83 = arith.truncf %67 : vector<16x8xf32> to vector<16x8xbf16>
    %cst_20 = arith.constant dense<0.000000e+00> : vector<16x8xf32>
    %84 = tpu.matmul %82, %83, %cst_20 {dimension_numbers = #tpu.dot_dimension_numbers<[1], [0], [0], [1], [0, 0, 1, 1], [], []>} : vector<16x16xbf16>, vector<16x8xbf16>, vector<16x8xf32> -> vector<16x8xf32>
    %85 = tpu.concatenate %24, %44, %64, %84 in 1 : vector<16x8xf32>, vector<16x8xf32>, vector<16x8xf32>, vector<16x8xf32> -> vector<16x32xf32>
    %86 = arith.truncf %85 : vector<16x32xf32> to vector<16x32xbf16>
    %c0_21 = arith.constant 0 : index
    %c0_22 = arith.constant 0 : index
    %87 = vector.load %arg2[%c0_21, %c0_22] : memref<32x32xbf16, #tpu.memory_space<vmem>>, vector<32x32xbf16>
    %cst_23 = arith.constant dense<0.000000e+00> : vector<16x32xf32>
    %88 = tpu.matmul %86, %87, %cst_23 {dimension_numbers = #tpu.dot_dimension_numbers<[1], [0], [0], [1], [0, 0, 1, 1], [], []>} : vector<16x32xbf16>, vector<32x32xbf16>, vector<16x32xf32> -> vector<16x32xf32>
    %c0_24 = arith.constant 0 : index
    %c0_25 = arith.constant 0 : index
    %89 = vector.load %arg3[%c0_24, %c0_25] : memref<1x32xf32, #tpu.memory_space<vmem>>, vector<1x32xf32>
    %90 = vector.broadcast %89 : vector<1x32xf32> to vector<16x32xf32>
    %91 = arith.addf %88, %90 : vector<16x32xf32>
    %c0_26 = arith.constant 0 : index
    %c0_27 = arith.constant 0 : index
    %92 = vector.load %arg5[%c0_26, %c0_27] : memref<16x32xf32, #tpu.memory_space<vmem>>, vector<16x32xf32>
    tpu.vector_store %arg5[%c0_26, %c0_27], %91 {strides = array<i32>} : memref<16x32xf32, #tpu.memory_space<vmem>>, vector<16x32xf32>,
    return
  }
}

</mosaic_0001>

<llo_original>
// kernel: multi_head_attention.1
$region0: #{multi_head_attention.1}
  #allocation0 [shape = 'u32[]', space=smem, size = 0x4, offset = 0x4, fixed_abs, tag = 'smem constant byte address 0x4 - core index']
  #allocation1 [shape = 'u32[144,128]{1,0:T(1,128)}', space=vmem, size = 0x12000, scoped, tag = 'internal scratch']
  %s0 = inlined_call_operand.hbm [shape: f32[16,32], index: 0, kind: input, shape index: {}]
  %s1 = inlined_call_operand.hbm [shape: bf16[32,96], index: 1, kind: input, shape index: {}]
  %s2 = inlined_call_operand.hbm [shape: bf16[32,32], index: 2, kind: input, shape index: {}]
  %s3 = inlined_call_operand.vmem [shape: f32[1,32], index: 3, kind: input, shape index: {}]
  %s4 = inlined_call_operand.vmem [shape: f32[16,16], index: 4, kind: input, shape index: {}]
  %s5 = inlined_call_operand.hbm [shape: f32[16,32], index: 5, kind: output, shape index: {}]
  %s6 = sld [smem:[#allocation0]]
  $region42: #{multi_head_attention.1} parent=0
    _
  %s8 = ssub.s32 1, %s6
  %s9 = scalar_select 0, %s8, %s6
  $region1: #{multi_head_attention.1} parent=0
    #allocation2 [shape = 'u8[8192]{0}', space=vmem, size = 0x2000, scoped, tag = 'input window, operand 0, single buffered']
    #allocation3 [shape = 's32[1]{0}', space=sflag, size = 0x4, scoped, tag = 'scoped memory for multi_head_attention.1']
    #allocation4 [shape = 's32[1]{0}', space=sflag, size = 0x4, scoped, tag = 'scoped memory for multi_head_attention.1']
    #allocation5 [shape = 'u8[8192]{0}', space=vmem, size = 0x2000, scoped, tag = 'input window, operand 1, single buffered']
    #allocation6 [shape = 's32[1]{0}', space=sflag, size = 0x4, scoped, tag = 'scoped memory for multi_head_attention.1']
    #allocation7 [shape = 'u8[8192]{0}', space=vmem, size = 0x2000, scoped, tag = 'input window, operand 2, single buffered']
    #allocation8 [shape = 'u8[8192]{0}', space=vmem, size = 0x2000, scoped, tag = 'output window, operand 0, single buffered']
    %10 = vsyncpa [#allocation3], 0
    %11 = vsyncpa [#allocation6], 0
    %12 = vsyncpa [#allocation4], 0
    // Predicated region
    $region2: #{multi_head_attention.1} parent=1 // pred_check
      _
    $region3: #{multi_head_attention.1} parent=1 // pred_check_branch
      %14 = sbr.rel (0) target = $region5
    $region4: #{multi_head_attention.1} parent=1 // pred_region
      %s16 = ssub.s32 256, 256
      %17 = vsyncadd [#allocation3], %s16
      %s18 = sshll.u32 [#allocation2], 4
      %s19 = int_to_ptr.vmem [resolvable:$true] %s18
      %24 = dma.hbm_to_vmem [thread:$0]  %s0, 256, %s19, [#allocation3], 128, 128, 8
    $region5: #{multi_head_attention.1} parent=1 // pred_fallthru
      _
    // Predicated region
    $region6: #{multi_head_attention.1} parent=1 // pred_check
      _
    $region7: #{multi_head_attention.1} parent=1 // pred_check_branch
      %26 = sbr.rel (0) target = $region9
    $region8: #{multi_head_attention.1} parent=1 // pred_region
      %s28 = ssub.s32 256, 256
      %29 = vsyncadd [#allocation6], %s28
      %s30 = sshll.u32 [#allocation5], 4
      %s31 = int_to_ptr.vmem [resolvable:$true] %s30
      %36 = dma.hbm_to_vmem [thread:$0]  %s1, 256, %s31, [#allocation6], 64, 64, 4
    $region9: #{multi_head_attention.1} parent=1 // pred_fallthru
      _
    // Predicated region
    $region10: #{multi_head_attention.1} parent=1 // pred_check
      _
    $region11: #{multi_head_attention.1} parent=1 // pred_check_branch
      %38 = sbr.rel (0) target = $region13
    $region12: #{multi_head_attention.1} parent=1 // pred_region
      %s40 = ssub.s32 256, 256
      %41 = vsyncadd [#allocation6], %s40
      %s42 = sshll.u32 [#allocation7], 4
      %s43 = int_to_ptr.vmem [resolvable:$true] %s42
      %48 = dma.hbm_to_vmem [thread:$0]  %s2, 256, %s43, [#allocation6], 64, 64, 4
    $region13: #{multi_head_attention.1} parent=1 // pred_fallthru
      _
    // Predicated region
    $region14: #{multi_head_attention.1} parent=1 // pred_check
      _
    $region15: #{multi_head_attention.1} parent=1 // pred_check_branch
      %50 = sbr.rel (0) target = $region17
    $region16: #{multi_head_attention.1} parent=1 // pred_region
      _
    $region17: #{multi_head_attention.1} parent=1 // pred_fallthru
      _
    // Predicated region
    $region18: #{multi_head_attention.1} parent=1 // pred_check
      _
    $region19: #{multi_head_attention.1} parent=1 // pred_check_branch
      %52 = sbr.rel (0) target = $region21
    $region20: #{multi_head_attention.1} parent=1 // pred_region
      _
    $region21: #{multi_head_attention.1} parent=1 // pred_fallthru
      _
    // Predicated region
    $region22: #{multi_head_attention.1} parent=1 // pred_check
      _
    $region23: #{multi_head_attention.1} parent=1 // pred_check_branch
      %54 = sbr.rel (0) target = $region25
    $region24: #{multi_head_attention.1} parent=1 // pred_region
      %55 = dma.done [#allocation3], 256
    $region25: #{multi_head_attention.1} parent=1 // pred_fallthru
      _
    // Predicated region
    $region26: #{multi_head_attention.1} parent=1 // pred_check
      _
    $region27: #{multi_head_attention.1} parent=1 // pred_check_branch
      %57 = sbr.rel (0) target = $region29
    $region28: #{multi_head_attention.1} parent=1 // pred_region
      %58 = dma.done [#allocation6], 256
    $region29: #{multi_head_attention.1} parent=1 // pred_fallthru
      _
    // Predicated region
    $region30: #{multi_head_attention.1} parent=1 // pred_check
      _
    $region31: #{multi_head_attention.1} parent=1 // pred_check_branch
      %60 = sbr.rel (0) target = $region33
    $region32: #{multi_head_attention.1} parent=1 // pred_region
      %61 = dma.done [#allocation6], 256
    $region33: #{multi_head_attention.1} parent=1 // pred_fallthru
      _
    %v63 = vld [vmem:[#allocation2] sm:$0xff]
    %v64 = vld [vmem:[#allocation2 + $0x8] sm:$0xff]
    %v65 = vpack.c.bf16 %v64, %v63
    %v66 = vld [vmem:[#allocation5] sm:$0xf]
    %v67 = vld [vmem:[#allocation5 + $0x4] sm:$0xf]
    %v68 = vld [vmem:[#allocation5 + $0x8] sm:$0xf]
    %v69 = vld [vmem:[#allocation5 + $0xc] sm:$0xf]
    %v74 = vunpack.c.l.b16 %v66
    %v75 = vunpack.c.l.b16 %v67
    %v76 = vunpack.c.l.b16 %v68
    %v77 = vunpack.c.l.b16 %v69
    %v78 = vpack.c.b16 %v75, %v74
    %v79 = vpack.c.b16 %v77, %v76
    %vm82 = vcmask 261120
    %v84 = vsel %vm82, %v65, 0
    %86 = vmatprep.subr.bf16.mxu0 0
    %87 = vmatpush1.bf16.msra.mxu0 %v78
    %88 = vmatprep.subr.bf16.mxu0 0
    %89 = vmatpush1.bf16.msra.mxu0 %v79
    %90 = vmatprep.subr.bf16.mxu0 0
    %91 = vmatpush1.bf16.msra.mxu0 0
    %92 = vmatprep.subr.bf16.mxu0 0
    %93 = vmatpush1.bf16.msra.mxu0 0
    %94 = vmatprep.subr.bf16.mxu0 0
    %95 = vmatpush1.bf16.msra.mxu0 0
    %96 = vmatprep.subr.bf16.mxu0 0
    %97 = vmatpush1.bf16.msra.mxu0 0
    %98 = vmatprep.subr.bf16.mxu0 0
    %99 = vmatpush1.bf16.msra.mxu0 0
    %100 = vmatprep.subr.bf16.mxu0 0
    %101 = vmatpush1.bf16.msra.mxu0 0
    %102 = vmatprep.subr.bf16.mxu0 0
    %103 = vmatpush1.bf16.msra.mxu0 0
    %104 = vmatprep.subr.bf16.mxu0 0
    %105 = vmatpush1.bf16.msra.mxu0 0
    %106 = vmatprep.subr.bf16.mxu0 0
    %107 = vmatpush1.bf16.msra.mxu0 0
    %108 = vmatprep.subr.bf16.mxu0 0
    %109 = vmatpush1.bf16.msra.mxu0 0
    %110 = vmatprep.subr.bf16.mxu0 0
    %111 = vmatpush1.bf16.msra.mxu0 0
    %112 = vmatprep.subr.bf16.mxu0 0
    %113 = vmatpush1.bf16.msra.mxu0 0
    %114 = vmatprep.subr.bf16.mxu0 0
    %115 = vmatpush1.bf16.msra.mxu0 0
    %116 = vmatprep.subr.bf16.mxu0 0
    %117 = vmatpush1.bf16.msra.mxu0 0
    %118 = vmatprep.mubr.bf16.mxu0 0
    %119 = vmatmul.mubr.bf16.gmra.mrb[0].mxu0 %v84
    %v120 = vpop.f32.mrb[0].mxu0
    %v121 = vadd.f32 0.0, %v120
    %v122 = vpop.f32.mrb[0].mxu0
    %v123 = vpop.f32.mrb[0].mxu0
    %v124 = vadd.f32 0.0, %v123
    %v125 = vpop.f32.mrb[0].mxu0
    %126 = vdwg.mxu0
    %v127 = vld [vmem:[%s4] sm:$0xff]
    %v128 = vld [vmem:[%s4 + $0x8] sm:$0xff]
    %v129 = vpack.c.bf16 %v124, %v121
    %131 = vrot.lane.b32.xlu0 %v129, 96
    %v132 = vpop.permute.xlu0 %131
    %vm133 = vcmask 64512
    %v135 = vsel %vm133, %v129, 0
    %v138 = vsel %vm133, %v132, 0
    %140 = vmatprep.subr.bf16.mxu0 0
    %141 = vmatpush1.bf16.xpose.msra.mxu0 %v138
    %142 = vmatprep.subr.bf16.mxu0 0
    %143 = vmatpush1.bf16.xpose.msra.mxu0 0
    %144 = vmatprep.subr.bf16.mxu0 0
    %145 = vmatpush1.bf16.xpose.msra.mxu0 0
    %146 = vmatprep.subr.bf16.mxu0 0
    %147 = vmatpush1.bf16.xpose.msra.mxu0 0
    %148 = vmatprep.subr.bf16.mxu0 0
    %149 = vmatpush1.bf16.xpose.msra.mxu0 0
    %150 = vmatprep.subr.bf16.mxu0 0
    %151 = vmatpush1.bf16.xpose.msra.mxu0 0
    %152 = vmatprep.subr.bf16.mxu0 0
    %153 = vmatpush1.bf16.xpose.msra.mxu0 0
    %154 = vmatprep.subr.bf16.mxu0 0
    %155 = vmatpush1.bf16.xpose.msra.mxu0 0
    %156 = vmatprep.subr.bf16.mxu0 0
    %157 = vmatpush1.bf16.xpose.msra.mxu0 0
    %158 = vmatprep.subr.bf16.mxu0 0
    %159 = vmatpush1.bf16.xpose.msra.mxu0 0
    %160 = vmatprep.subr.bf16.mxu0 0
    %161 = vmatpush1.bf16.xpose.msra.mxu0 0
    %162 = vmatprep.subr.bf16.mxu0 0
    %163 = vmatpush1.bf16.xpose.msra.mxu0 0
    %164 = vmatprep.subr.bf16.mxu0 0
    %165 = vmatpush1.bf16.xpose.msra.mxu0 0
    %166 = vmatprep.subr.bf16.mxu0 0
    %167 = vmatpush1.bf16.xpose.msra.mxu0 0
    %168 = vmatprep.subr.bf16.mxu0 0
    %169 = vmatpush1.bf16.xpose.msra.mxu0 0
    %170 = vmatprep.subr.bf16.mxu0 0
    %171 = vmatpush1.bf16.xpose.msra.mxu0 0
    %172 = vmatprep.mubr.bf16.mxu0 0
    %173 = vmatmul.mubr.bf16.gmra.mrb[0].mxu0 %v135
    %v174 = vpop.f32.mrb[0].mxu0
    %v175 = vadd.f32 %v127, %v174
    %v176 = vpop.f32.mrb[0].mxu0
    %v177 = vpop.f32.mrb[0].mxu0
    %v178 = vadd.f32 %v128, %v177
    %v179 = vpop.f32.mrb[0].mxu0
    %180 = vdwg.mxu0
    %vm181 = vcmask 130048
    %v182 = vsel %vm181, %v175, -inf
    %183 = vmax.xlane.f32.xlu0 %v182
    %v184 = vpop.xlane.xlu0 %183
    %v185 = vsel %vm181, %v178, -inf
    %186 = vmax.xlane.f32.xlu0 %v185
    %v187 = vpop.xlane.xlu0 %186
    %v188 = vsub.f32 %v175, %v184
    %v189 = vsub.f32 %v178, %v187
    %v190 = vmul.f32 %v188, 1.442695
    %v191 = vpow.pop %v190
    %v192 = vmul.f32 %v189, 1.442695
    %v193 = vpow.pop %v192
    %v194 = vsel %vm181, %v191, 0.0
    %195 = vadd.xlane.f32.xlu0 %v194
    %v196 = vpop.xlane.xlu0 %195
    %v197 = vsel %vm181, %v193, 0.0
    %198 = vadd.xlane.f32.xlu0 %v197
    %v199 = vpop.xlane.xlu0 %198
    %v200 = vrcp.pop %v196
    %v201 = vrcp.pop %v199
    %v202 = vmul.f32 %v191, %v200
    %v203 = vmul.f32 %v193, %v201
    %v204 = vpack.c.bf16 %v203, %v202
    %205 = vrot.lane.b32.xlu0 %v129, 64
    %v206 = vpop.permute.xlu0 %205
    %v209 = vsel %vm181, %v204, 0
    %211 = vmatprep.subr.bf16.mxu0 0
    %212 = vmatpush1.bf16.msra.mxu0 %v206
    %213 = vmatprep.subr.bf16.mxu0 0
    %214 = vmatpush1.bf16.msra.mxu0 0
    %215 = vmatprep.subr.bf16.mxu0 0
    %216 = vmatpush1.bf16.msra.mxu0 0
    %217 = vmatprep.subr.bf16.mxu0 0
    %218 = vmatpush1.bf16.msra.mxu0 0
    %219 = vmatprep.subr.bf16.mxu0 0
    %220 = vmatpush1.bf16.msra.mxu0 0
    %221 = vmatprep.subr.bf16.mxu0 0
    %222 = vmatpush1.bf16.msra.mxu0 0
    %223 = vmatprep.subr.bf16.mxu0 0
    %224 = vmatpush1.bf16.msra.mxu0 0
    %225 = vmatprep.subr.bf16.mxu0 0
    %226 = vmatpush1.bf16.msra.mxu0 0
    %227 = vmatprep.subr.bf16.mxu0 0
    %228 = vmatpush1.bf16.msra.mxu0 0
    %229 = vmatprep.subr.bf16.mxu0 0
    %230 = vmatpush1.bf16.msra.mxu0 0
    %231 = vmatprep.subr.bf16.mxu0 0
    %232 = vmatpush1.bf16.msra.mxu0 0
    %233 = vmatprep.subr.bf16.mxu0 0
    %234 = vmatpush1.bf16.msra.mxu0 0
    %235 = vmatprep.subr.bf16.mxu0 0
    %236 = vmatpush1.bf16.msra.mxu0 0
    %237 = vmatprep.subr.bf16.mxu0 0
    %238 = vmatpush1.bf16.msra.mxu0 0
    %239 = vmatprep.subr.bf16.mxu0 0
    %240 = vmatpush1.bf16.msra.mxu0 0
    %241 = vmatprep.subr.bf16.mxu0 0
    %242 = vmatpush1.bf16.msra.mxu0 0
    %243 = vmatprep.mubr.bf16.mxu0 0
    %244 = vmatmul.mubr.bf16.gmra.mrb[0].mxu0 %v209
    %v245 = vpop.f32.mrb[0].mxu0
    %v246 = vadd.f32 0.0, %v245
    %v247 = vpop.f32.mrb[0].mxu0
    %v248 = vpop.f32.mrb[0].mxu0
    %v249 = vadd.f32 0.0, %v248
    %v250 = vpop.f32.mrb[0].mxu0
    %251 = vdwg.mxu0
    %252 = vrot.lane.b32.xlu0 %v129, 120
    %v253 = vpop.permute.xlu0 %252
    %254 = vrot.lane.b32.xlu0 %v129, 88
    %v255 = vpop.permute.xlu0 %254
    %v257 = vsel %vm133, %v253, 0
    %v260 = vsel %vm133, %v255, 0
    %262 = vmatprep.subr.bf16.mxu0 0
    %263 = vmatpush1.bf16.xpose.msra.mxu0 %v260
    %264 = vmatprep.subr.bf16.mxu0 0
    %265 = vmatpush1.bf16.xpose.msra.mxu0 0
    %266 = vmatprep.subr.bf16.mxu0 0
    %267 = vmatpush1.bf16.xpose.msra.mxu0 0
    %268 = vmatprep.subr.bf16.mxu0 0
    %269 = vmatpush1.bf16.xpose.msra.mxu0 0
    %270 = vmatprep.subr.bf16.mxu0 0
    %271 = vmatpush1.bf16.xpose.msra.mxu0 0
    %272 = vmatprep.subr.bf16.mxu0 0
    %273 = vmatpush1.bf16.xpose.msra.mxu0 0
    %274 = vmatprep.subr.bf16.mxu0 0
    %275 = vmatpush1.bf16.xpose.msra.mxu0 0
    %276 = vmatprep.subr.bf16.mxu0 0
    %277 = vmatpush1.bf16.xpose.msra.mxu0 0
    %278 = vmatprep.subr.bf16.mxu0 0
    %279 = vmatpush1.bf16.xpose.msra.mxu0 0
    %280 = vmatprep.subr.bf16.mxu0 0
    %281 = vmatpush1.bf16.xpose.msra.mxu0 0
    %282 = vmatprep.subr.bf16.mxu0 0
    %283 = vmatpush1.bf16.xpose.msra.mxu0 0
    %284 = vmatprep.subr.bf16.mxu0 0
    %285 = vmatpush1.bf16.xpose.msra.mxu0 0
    %286 = vmatprep.subr.bf16.mxu0 0
    %287 = vmatpush1.bf16.xpose.msra.mxu0 0
    %288 = vmatprep.subr.bf16.mxu0 0
    %289 = vmatpush1.bf16.xpose.msra.mxu0 0
    %290 = vmatprep.subr.bf16.mxu0 0
    %291 = vmatpush1.bf16.xpose.msra.mxu0 0
    %292 = vmatprep.subr.bf16.mxu0 0
    %293 = vmatpush1.bf16.xpose.msra.mxu0 0
    %294 = vmatprep.mubr.bf16.mxu0 0
    %295 = vmatmul.mubr.bf16.gmra.mrb[0].mxu0 %v257
    %v296 = vpop.f32.mrb[0].mxu0
    %v297 = vadd.f32 %v127, %v296
    %v298 = vpop.f32.mrb[0].mxu0
    %v299 = vpop.f32.mrb[0].mxu0
    %v300 = vadd.f32 %v128, %v299
    %v301 = vpop.f32.mrb[0].mxu0
    %302 = vdwg.mxu0
    %v303 = vsel %vm181, %v297, -inf
    %304 = vmax.xlane.f32.xlu0 %v303
    %v305 = vpop.xlane.xlu0 %304
    %v306 = vsel %vm181, %v300, -inf
    %307 = vmax.xlane.f32.xlu0 %v306
    %v308 = vpop.xlane.xlu0 %307
    %v309 = vsub.f32 %v297, %v305
    %v310 = vsub.f32 %v300, %v308
    %v311 = vmul.f32 %v309, 1.442695
    %v312 = vpow.pop %v311
    %v313 = vmul.f32 %v310, 1.442695
    %v314 = vpow.pop %v313
    %v315 = vsel %vm181, %v312, 0.0
    %316 = vadd.xlane.f32.xlu0 %v315
    %v317 = vpop.xlane.xlu0 %316
    %v318 = vsel %vm181, %v314, 0.0
    %319 = vadd.xlane.f32.xlu0 %v318
    %v320 = vpop.xlane.xlu0 %319
    %v321 = vrcp.pop %v317
    %v322 = vrcp.pop %v320
    %v323 = vmul.f32 %v312, %v321
    %v324 = vmul.f32 %v314, %v322
    %v325 = vpack.c.bf16 %v324, %v323
    %326 = vrot.lane.b32.xlu0 %v129, 56
    %v327 = vpop.permute.xlu0 %326
    %v330 = vsel %vm181, %v325, 0
    %332 = vmatprep.subr.bf16.mxu0 0
    %333 = vmatpush1.bf16.msra.mxu0 %v327
    %334 = vmatprep.subr.bf16.mxu0 0
    %335 = vmatpush1.bf16.msra.mxu0 0
    %336 = vmatprep.subr.bf16.mxu0 0
    %337 = vmatpush1.bf16.msra.mxu0 0
    %338 = vmatprep.subr.bf16.mxu0 0
    %339 = vmatpush1.bf16.msra.mxu0 0
    %340 = vmatprep.subr.bf16.mxu0 0
    %341 = vmatpush1.bf16.msra.mxu0 0
    %342 = vmatprep.subr.bf16.mxu0 0
    %343 = vmatpush1.bf16.msra.mxu0 0
    %344 = vmatprep.subr.bf16.mxu0 0
    %345 = vmatpush1.bf16.msra.mxu0 0
    %346 = vmatprep.subr.bf16.mxu0 0
    %347 = vmatpush1.bf16.msra.mxu0 0
    %348 = vmatprep.subr.bf16.mxu0 0
    %349 = vmatpush1.bf16.msra.mxu0 0
    %350 = vmatprep.subr.bf16.mxu0 0
    %351 = vmatpush1.bf16.msra.mxu0 0
    %352 = vmatprep.subr.bf16.mxu0 0
    %353 = vmatpush1.bf16.msra.mxu0 0
    %354 = vmatprep.subr.bf16.mxu0 0
    %355 = vmatpush1.bf16.msra.mxu0 0
    %356 = vmatprep.subr.bf16.mxu0 0
    %357 = vmatpush1.bf16.msra.mxu0 0
    %358 = vmatprep.subr.bf16.mxu0 0
    %359 = vmatpush1.bf16.msra.mxu0 0
    %360 = vmatprep.subr.bf16.mxu0 0
    %361 = vmatpush1.bf16.msra.mxu0 0
    %362 = vmatprep.subr.bf16.mxu0 0
    %363 = vmatpush1.bf16.msra.mxu0 0
    %364 = vmatprep.mubr.bf16.mxu0 0
    %365 = vmatmul.mubr.bf16.gmra.mrb[0].mxu0 %v330
    %v366 = vpop.f32.mrb[0].mxu0
    %v367 = vadd.f32 0.0, %v366
    %v368 = vpop.f32.mrb[0].mxu0
    %v369 = vpop.f32.mrb[0].mxu0
    %v370 = vadd.f32 0.0, %v369
    %v371 = vpop.f32.mrb[0].mxu0
    %372 = vdwg.mxu0
    %373 = vrot.lane.b32.xlu0 %v129, 112
    %v374 = vpop.permute.xlu0 %373
    %375 = vrot.lane.b32.xlu0 %v129, 80
    %v376 = vpop.permute.xlu0 %375
    %v378 = vsel %vm133, %v374, 0
    %v381 = vsel %vm133, %v376, 0
    %383 = vmatprep.subr.bf16.mxu0 0
    %384 = vmatpush1.bf16.xpose.msra.mxu0 %v381
    %385 = vmatprep.subr.bf16.mxu0 0
    %386 = vmatpush1.bf16.xpose.msra.mxu0 0
    %387 = vmatprep.subr.bf16.mxu0 0
    %388 = vmatpush1.bf16.xpose.msra.mxu0 0
    %389 = vmatprep.subr.bf16.mxu0 0
    %390 = vmatpush1.bf16.xpose.msra.mxu0 0
    %391 = vmatprep.subr.bf16.mxu0 0
    %392 = vmatpush1.bf16.xpose.msra.mxu0 0
    %393 = vmatprep.subr.bf16.mxu0 0
    %394 = vmatpush1.bf16.xpose.msra.mxu0 0
    %395 = vmatprep.subr.bf16.mxu0 0
    %396 = vmatpush1.bf16.xpose.msra.mxu0 0
    %397 = vmatprep.subr.bf16.mxu0 0
    %398 = vmatpush1.bf16.xpose.msra.mxu0 0
    %399 = vmatprep.subr.bf16.mxu0 0
    %400 = vmatpush1.bf16.xpose.msra.mxu0 0
    %401 = vmatprep.subr.bf16.mxu0 0
    %402 = vmatpush1.bf16.xpose.msra.mxu0 0
    %403 = vmatprep.subr.bf16.mxu0 0
    %404 = vmatpush1.bf16.xpose.msra.mxu0 0
    %405 = vmatprep.subr.bf16.mxu0 0
    %406 = vmatpush1.bf16.xpose.msra.mxu0 0
    %407 = vmatprep.subr.bf16.mxu0 0
    %408 = vmatpush1.bf16.xpose.msra.mxu0 0
    %409 = vmatprep.subr.bf16.mxu0 0
    %410 = vmatpush1.bf16.xpose.msra.mxu0 0
    %411 = vmatprep.subr.bf16.mxu0 0
    %412 = vmatpush1.bf16.xpose.msra.mxu0 0
    %413 = vmatprep.subr.bf16.mxu0 0
    %414 = vmatpush1.bf16.xpose.msra.mxu0 0
    %415 = vmatprep.mubr.bf16.mxu0 0
    %416 = vmatmul.mubr.bf16.gmra.mrb[0].mxu0 %v378
    %v417 = vpop.f32.mrb[0].mxu0
    %v418 = vadd.f32 %v127, %v417
    %v419 = vpop.f32.mrb[0].mxu0
    %v420 = vpop.f32.mrb[0].mxu0
    %v421 = vadd.f32 %v128, %v420
    %v422 = vpop.f32.mrb[0].mxu0
    %423 = vdwg.mxu0
    %v424 = vsel %vm181, %v418, -inf
    %425 = vmax.xlane.f32.xlu0 %v424
    %v426 = vpop.xlane.xlu0 %425
    %v427 = vsel %vm181, %v421, -inf
    %428 = vmax.xlane.f32.xlu0 %v427
    %v429 = vpop.xlane.xlu0 %428
    %v430 = vsub.f32 %v418, %v426
    %v431 = vsub.f32 %v421, %v429
    %v432 = vmul.f32 %v430, 1.442695
    %v433 = vpow.pop %v432
    %v434 = vmul.f32 %v431, 1.442695
    %v435 = vpow.pop %v434
    %v436 = vsel %vm181, %v433, 0.0
    %437 = vadd.xlane.f32.xlu0 %v436
    %v438 = vpop.xlane.xlu0 %437
    %v439 = vsel %vm181, %v435, 0.0
    %440 = vadd.xlane.f32.xlu0 %v439
    %v441 = vpop.xlane.xlu0 %440
    %v442 = vrcp.pop %v438
    %v443 = vrcp.pop %v441
    %v444 = vmul.f32 %v433, %v442
    %v445 = vmul.f32 %v435, %v443
    %v446 = vpack.c.bf16 %v445, %v444
    %447 = vrot.lane.b32.xlu0 %v129, 48
    %v448 = vpop.permute.xlu0 %447
    %v451 = vsel %vm181, %v446, 0
    %453 = vmatprep.subr.bf16.mxu0 0
    %454 = vmatpush1.bf16.msra.mxu0 %v448
    %455 = vmatprep.subr.bf16.mxu0 0
    %456 = vmatpush1.bf16.msra.mxu0 0
    %457 = vmatprep.subr.bf16.mxu0 0
    %458 = vmatpush1.bf16.msra.mxu0 0
    %459 = vmatprep.subr.bf16.mxu0 0
    %460 = vmatpush1.bf16.msra.mxu0 0
    %461 = vmatprep.subr.bf16.mxu0 0
    %462 = vmatpush1.bf16.msra.mxu0 0
    %463 = vmatprep.subr.bf16.mxu0 0
    %464 = vmatpush1.bf16.msra.mxu0 0
    %465 = vmatprep.subr.bf16.mxu0 0
    %466 = vmatpush1.bf16.msra.mxu0 0
    %467 = vmatprep.subr.bf16.mxu0 0
    %468 = vmatpush1.bf16.msra.mxu0 0
    %469 = vmatprep.subr.bf16.mxu0 0
    %470 = vmatpush1.bf16.msra.mxu0 0
    %471 = vmatprep.subr.bf16.mxu0 0
    %472 = vmatpush1.bf16.msra.mxu0 0
    %473 = vmatprep.subr.bf16.mxu0 0
    %474 = vmatpush1.bf16.msra.mxu0 0
    %475 = vmatprep.subr.bf16.mxu0 0
    %476 = vmatpush1.bf16.msra.mxu0 0
    %477 = vmatprep.subr.bf16.mxu0 0
    %478 = vmatpush1.bf16.msra.mxu0 0
    %479 = vmatprep.subr.bf16.mxu0 0
    %480 = vmatpush1.bf16.msra.mxu0 0
    %481 = vmatprep.subr.bf16.mxu0 0
    %482 = vmatpush1.bf16.msra.mxu0 0
    %483 = vmatprep.subr.bf16.mxu0 0
    %484 = vmatpush1.bf16.msra.mxu0 0
    %485 = vmatprep.mubr.bf16.mxu0 0
    %486 = vmatmul.mubr.bf16.gmra.mrb[0].mxu0 %v451
    %v487 = vpop.f32.mrb[0].mxu0
    %v488 = vadd.f32 0.0, %v487
    %v489 = vpop.f32.mrb[0].mxu0
    %v490 = vpop.f32.mrb[0].mxu0
    %v491 = vadd.f32 0.0, %v490
    %v492 = vpop.f32.mrb[0].mxu0
    %493 = vdwg.mxu0
    %494 = vrot.lane.b32.xlu0 %v129, 104
    %v495 = vpop.permute.xlu0 %494
    %496 = vrot.lane.b32.xlu0 %v129, 72
    %v497 = vpop.permute.xlu0 %496
    %v499 = vsel %vm133, %v495, 0
    %v502 = vsel %vm133, %v497, 0
    %504 = vmatprep.subr.bf16.mxu0 0
    %505 = vmatpush1.bf16.xpose.msra.mxu0 %v502
    %506 = vmatprep.subr.bf16.mxu0 0
    %507 = vmatpush1.bf16.xpose.msra.mxu0 0
    %508 = vmatprep.subr.bf16.mxu0 0
    %509 = vmatpush1.bf16.xpose.msra.mxu0 0
    %510 = vmatprep.subr.bf16.mxu0 0
    %511 = vmatpush1.bf16.xpose.msra.mxu0 0
    %512 = vmatprep.subr.bf16.mxu0 0
    %513 = vmatpush1.bf16.xpose.msra.mxu0 0
    %514 = vmatprep.subr.bf16.mxu0 0
    %515 = vmatpush1.bf16.xpose.msra.mxu0 0
    %516 = vmatprep.subr.bf16.mxu0 0
    %517 = vmatpush1.bf16.xpose.msra.mxu0 0
    %518 = vmatprep.subr.bf16.mxu0 0
    %519 = vmatpush1.bf16.xpose.msra.mxu0 0
    %520 = vmatprep.subr.bf16.mxu0 0
    %521 = vmatpush1.bf16.xpose.msra.mxu0 0
    %522 = vmatprep.subr.bf16.mxu0 0
    %523 = vmatpush1.bf16.xpose.msra.mxu0 0
    %524 = vmatprep.subr.bf16.mxu0 0
    %525 = vmatpush1.bf16.xpose.msra.mxu0 0
    %526 = vmatprep.subr.bf16.mxu0 0
    %527 = vmatpush1.bf16.xpose.msra.mxu0 0
    %528 = vmatprep.subr.bf16.mxu0 0
    %529 = vmatpush1.bf16.xpose.msra.mxu0 0
    %530 = vmatprep.subr.bf16.mxu0 0
    %531 = vmatpush1.bf16.xpose.msra.mxu0 0
    %532 = vmatprep.subr.bf16.mxu0 0
    %533 = vmatpush1.bf16.xpose.msra.mxu0 0
    %534 = vmatprep.subr.bf16.mxu0 0
    %535 = vmatpush1.bf16.xpose.msra.mxu0 0
    %536 = vmatprep.mubr.bf16.mxu0 0
    %537 = vmatmul.mubr.bf16.gmra.mrb[0].mxu0 %v499
    %v538 = vpop.f32.mrb[0].mxu0
    %v539 = vadd.f32 %v127, %v538
    %v540 = vpop.f32.mrb[0].mxu0
    %v541 = vpop.f32.mrb[0].mxu0
    %v542 = vadd.f32 %v128, %v541
    %v543 = vpop.f32.mrb[0].mxu0
    %544 = vdwg.mxu0
    %v545 = vsel %vm181, %v539, -inf
    %546 = vmax.xlane.f32.xlu0 %v545
    %v547 = vpop.xlane.xlu0 %546
    %v548 = vsel %vm181, %v542, -inf
    %549 = vmax.xlane.f32.xlu0 %v548
    %v550 = vpop.xlane.xlu0 %549
    %v551 = vsub.f32 %v539, %v547
    %v552 = vsub.f32 %v542, %v550
    %v553 = vmul.f32 %v551, 1.442695
    %v554 = vpow.pop %v553
    %v555 = vmul.f32 %v552, 1.442695
    %v556 = vpow.pop %v555
    %v557 = vsel %vm181, %v554, 0.0
    %558 = vadd.xlane.f32.xlu0 %v557
    %v559 = vpop.xlane.xlu0 %558
    %v560 = vsel %vm181, %v556, 0.0
    %561 = vadd.xlane.f32.xlu0 %v560
    %v562 = vpop.xlane.xlu0 %561
    %v563 = vrcp.pop %v559
    %v564 = vrcp.pop %v562
    %v565 = vmul.f32 %v554, %v563
    %v566 = vmul.f32 %v556, %v564
    %v567 = vpack.c.bf16 %v566, %v565
    %568 = vrot.lane.b32.xlu0 %v129, 40
    %v569 = vpop.permute.xlu0 %568
    %v572 = vsel %vm181, %v567, 0
    %574 = vmatprep.subr.bf16.mxu0 0
    %575 = vmatpush1.bf16.msra.mxu0 %v569
    %576 = vmatprep.subr.bf16.mxu0 0
    %577 = vmatpush1.bf16.msra.mxu0 0
    %578 = vmatprep.subr.bf16.mxu0 0
    %579 = vmatpush1.bf16.msra.mxu0 0
    %580 = vmatprep.subr.bf16.mxu0 0
    %581 = vmatpush1.bf16.msra.mxu0 0
    %582 = vmatprep.subr.bf16.mxu0 0
    %583 = vmatpush1.bf16.msra.mxu0 0
    %584 = vmatprep.subr.bf16.mxu0 0
    %585 = vmatpush1.bf16.msra.mxu0 0
    %586 = vmatprep.subr.bf16.mxu0 0
    %587 = vmatpush1.bf16.msra.mxu0 0
    %588 = vmatprep.subr.bf16.mxu0 0
    %589 = vmatpush1.bf16.msra.mxu0 0
    %590 = vmatprep.subr.bf16.mxu0 0
    %591 = vmatpush1.bf16.msra.mxu0 0
    %592 = vmatprep.subr.bf16.mxu0 0
    %593 = vmatpush1.bf16.msra.mxu0 0
    %594 = vmatprep.subr.bf16.mxu0 0
    %595 = vmatpush1.bf16.msra.mxu0 0
    %596 = vmatprep.subr.bf16.mxu0 0
    %597 = vmatpush1.bf16.msra.mxu0 0
    %598 = vmatprep.subr.bf16.mxu0 0
    %599 = vmatpush1.bf16.msra.mxu0 0
    %600 = vmatprep.subr.bf16.mxu0 0
    %601 = vmatpush1.bf16.msra.mxu0 0
    %602 = vmatprep.subr.bf16.mxu0 0
    %603 = vmatpush1.bf16.msra.mxu0 0
    %604 = vmatprep.subr.bf16.mxu0 0
    %605 = vmatpush1.bf16.msra.mxu0 0
    %606 = vmatprep.mubr.bf16.mxu0 0
    %607 = vmatmul.mubr.bf16.gmra.mrb[0].mxu0 %v572
    %v608 = vpop.f32.mrb[0].mxu0
    %v609 = vadd.f32 0.0, %v608
    %v610 = vpop.f32.mrb[0].mxu0
    %v611 = vpop.f32.mrb[0].mxu0
    %v612 = vadd.f32 0.0, %v611
    %v613 = vpop.f32.mrb[0].mxu0
    %614 = vdwg.mxu0
    %617 = vrot.lane.b32.xlu0 %v367, 8
    %v618 = vpop.permute.xlu0 %617
    %619 = vrot.lane.b32.xlu0 %v370, 8
    %v620 = vpop.permute.xlu0 %619
    %625 = vrot.lane.b32.xlu0 %v488, 16
    %v626 = vpop.permute.xlu0 %625
    %627 = vrot.lane.b32.xlu0 %v491, 16
    %v628 = vpop.permute.xlu0 %627
    %633 = vrot.lane.b32.xlu0 %v609, 24
    %v634 = vpop.permute.xlu0 %633
    %635 = vrot.lane.b32.xlu0 %v612, 24
    %v636 = vpop.permute.xlu0 %635
    %v639 = vsel %vm133, %v246, %v618
    %v640 = vsel %vm133, %v249, %v620
    %v641 = vsel %vm181, %v639, %v626
    %v642 = vsel %vm181, %v640, %v628
    %vm643 = vcmask 195584
    %v644 = vsel %vm643, %v641, %v634
    %v645 = vsel %vm643, %v642, %v636
    %v646 = vpack.c.bf16 %v645, %v644
    %v647 = vld [vmem:[#allocation7] sm:$0xf]
    %v648 = vld [vmem:[#allocation7 + $0x4] sm:$0xf]
    %v649 = vld [vmem:[#allocation7 + $0x8] sm:$0xf]
    %v650 = vld [vmem:[#allocation7 + $0xc] sm:$0xf]
    %v651 = vld [vmem:[%s3] sm:$0x1]
    %v653 = vlaneseq
    %v654 = vshrl.u32 %v653, 7
    %v655 = vsub.s32 0, %v654
    %v656 = vrot.slane %v651, %v655
    %v662 = vunpack.c.l.b16 %v647
    %v663 = vunpack.c.l.b16 %v648
    %v664 = vunpack.c.l.b16 %v649
    %v665 = vunpack.c.l.b16 %v650
    %v666 = vpack.c.b16 %v663, %v662
    %v667 = vpack.c.b16 %v665, %v664
    %v671 = vsel %vm82, %v646, 0
    %673 = vmatprep.subr.bf16.mxu0 0
    %674 = vmatpush1.bf16.msra.mxu0 %v666
    %675 = vmatprep.subr.bf16.mxu0 0
    %676 = vmatpush1.bf16.msra.mxu0 %v667
    %677 = vmatprep.subr.bf16.mxu0 0
    %678 = vmatpush1.bf16.msra.mxu0 0
    %679 = vmatprep.subr.bf16.mxu0 0
    %680 = vmatpush1.bf16.msra.mxu0 0
    %681 = vmatprep.subr.bf16.mxu0 0
    %682 = vmatpush1.bf16.msra.mxu0 0
    %683 = vmatprep.subr.bf16.mxu0 0
    %684 = vmatpush1.bf16.msra.mxu0 0
    %685 = vmatprep.subr.bf16.mxu0 0
    %686 = vmatpush1.bf16.msra.mxu0 0
    %687 = vmatprep.subr.bf16.mxu0 0
    %688 = vmatpush1.bf16.msra.mxu0 0
    %689 = vmatprep.subr.bf16.mxu0 0
    %690 = vmatpush1.bf16.msra.mxu0 0
    %691 = vmatprep.subr.bf16.mxu0 0
    %692 = vmatpush1.bf16.msra.mxu0 0
    %693 = vmatprep.subr.bf16.mxu0 0
    %694 = vmatpush1.bf16.msra.mxu0 0
    %695 = vmatprep.subr.bf16.mxu0 0
    %696 = vmatpush1.bf16.msra.mxu0 0
    %697 = vmatprep.subr.bf16.mxu0 0
    %698 = vmatpush1.bf16.msra.mxu0 0
    %699 = vmatprep.subr.bf16.mxu0 0
    %700 = vmatpush1.bf16.msra.mxu0 0
    %701 = vmatprep.subr.bf16.mxu0 0
    %702 = vmatpush1.bf16.msra.mxu0 0
    %703 = vmatprep.subr.bf16.mxu0 0
    %704 = vmatpush1.bf16.msra.mxu0 0
    %705 = vmatprep.mubr.bf16.mxu0 0
    %706 = vmatmul.mubr.bf16.gmra.mrb[0].mxu0 %v671
    %v707 = vpop.f32.mrb[0].mxu0
    %v708 = vadd.f32 %v656, %v707
    %v709 = vpop.f32.mrb[0].mxu0
    %v710 = vpop.f32.mrb[0].mxu0
    %v711 = vadd.f32 %v656, %v710
    %v712 = vpop.f32.mrb[0].mxu0
    %713 = vdwg.mxu0
    %714 = vst.msk [vmem:[#allocation8] sm:$0xff] %vm82, %v708
    %715 = vst.msk [vmem:[#allocation8 + $0x8] sm:$0xff] %vm82, %v711
    // Predicated region
    $region34: #{multi_head_attention.1} parent=1 // pred_check
      _
    $region35: #{multi_head_attention.1} parent=1 // pred_check_branch
      %717 = sbr.rel (0) target = $region37
    $region36: #{multi_head_attention.1} parent=1 // pred_region
      %s719 = ssub.s32 256, 256
      %720 = vsyncadd [#allocation4], %s719
      %s721 = sshll.u32 [#allocation8], 4
      %s722 = int_to_ptr.vmem [resolvable:$true] %s721
      %727 = dma.vmem_to_hbm [thread:$0]  %s722, 256, %s5, [#allocation4], 128, 128, 8
    $region37: #{multi_head_attention.1} parent=1 // pred_fallthru
      _
    // Predicated region
    $region38: #{multi_head_attention.1} parent=1 // pred_check
      _
    $region39: #{multi_head_attention.1} parent=1 // pred_check_branch
      %729 = sbr.rel (0) target = $region41
    $region40: #{multi_head_attention.1} parent=1 // pred_region
      %730 = dma.done [#allocation4], 256
    $region41: #{multi_head_attention.1} parent=1 // pred_fallthru
      _
    %731 = vsyncpa [#allocation3], 1
    %732 = vsyncpa [#allocation6], 1
    %733 = vsyncpa [#allocation4], 1

</llo_original>
